<compile_context>
chip_gen: v7x
topology: tpu7x:2x2x1
jax: 0.10.0
libtpu: 0.0.40
codegen_flags: <defaults>
</compile_context>

<pallas_src>
import functools

import jax
import jax.numpy as jnp
from jax.experimental import pallas as pl
from jax.experimental.pallas import tpu as pltpu


def mlp_kernel(x_ref,
               w1_ref, b1_ref,
               w2_ref, b2_ref,
               w3_ref, b3_ref,
               w4_ref, b4_ref,
               o_ref,
               *, compute_dtype):
    """Fused 4-layer MLP for one batch tile, batch-on-lanes layout.

    x_ref:  [14,  T]  (features on sublanes, batch on lanes)
    w1_ref: [64, 14]  b1_ref: [64, 1]   (f32)
    w2_ref: [64, 64]  b2_ref: [64, 1]   (w2/w3 pre-cast to compute_dtype)
    w3_ref: [32, 64]  b3_ref: [32, 1]
    w4_ref: [32,  1]  b4_ref: [ 1, 1]
    o_ref:  [ 1,  T]  lane-dense output row
    """
    cd = compute_dtype

    # Layer 1 (K=14): negligible FLOPs -> keep exact f32 (also sidesteps bf16
    # precision loss on raw-scale input features).
    # NOTE: on v6e/v7x this could alternatively be a 14-step VPU broadcast-MAC
    # to free MXU pushes; MXU is no longer the bottleneck here, so keep dot.
    h = jnp.dot(w1_ref[...], x_ref[...],
                preferred_element_type=jnp.float32) + b1_ref[...]
    h = jnp.maximum(h, 0.0)                                    # [64, T]

    # Layers 2-3 on the MXU in compute_dtype (bf16 fast path valid on
    # v5e/v6e/v7x), f32 accumulation; weights arrive pre-cast from the wrapper.
    h = jnp.dot(w2_ref[...], h.astype(cd),
                preferred_element_type=jnp.float32) + b2_ref[...]
    h = jnp.maximum(h, 0.0)                                    # [64, T]

    h = jnp.dot(w3_ref[...], h.astype(cd),
                preferred_element_type=jnp.float32) + b3_ref[...]
    h = jnp.maximum(h, 0.0)                                    # [32, T]

    # Output layer (out_features == 1): VPU multiply + sublane reduce instead
    # of a 1-wide MXU matmul; result is a lane-dense [1, T] row.
    out = jnp.sum(h * w4_ref[...], axis=0, keepdims=True) + b4_ref[...]
    o_ref[...] = out.astype(o_ref.dtype)


def boston_model_forward(x, params, *, tile_m=2048,
                         compute_dtype=jnp.float32, min_steps=2):
    """x: [N, 14] float32. params: PyTorch-layout weights ([out, in]) / biases.

    tile_m: max batch rows (lanes) per grid step; rounded to multiples of 128.
    compute_dtype: jnp.float32 (exact) or jnp.bfloat16 (fast MXU inputs for
      the 64x64 / 64x32 layers on v5e/v6e/v7x; layer 1 and the output layer
      stay f32).
    min_steps: minimum grid steps when N >= 256, so the 'parallel' batch axis
      feeds both TensorCores on v7x.
    """
    n, f = x.shape
    assert f == 14, "BostonModel expects 14 input features"

    # --- tile selection: batch lives on the lane axis -> multiples of 128 ---
    num_steps = pl.cdiv(n, tile_m)
    if n >= 2 * 128:
        num_steps = max(num_steps, min_steps)
    tile = ((pl.cdiv(n, num_steps) + 127) // 128) * 128
    num_tiles = pl.cdiv(n, tile)
    n_pad = num_tiles * tile

    # Batch-on-lanes input slab [14, n_pad]; padded columns are sliced off.
    xt = jnp.pad(x, ((0, n_pad - n), (0, 0))).T

    cd = compute_dtype
    w1 = params["w1"]                        # [64, 14] f32 (layer 1 exact)
    w2 = params["w2"].astype(cd)             # [64, 64] pre-cast once
    w3 = params["w3"].astype(cd)             # [32, 64] pre-cast once
    w4 = params["w4"].reshape(32, 1)         # column for the sublane reduce
    b1 = params["b1"].reshape(64, 1)
    b2 = params["b2"].reshape(64, 1)
    b3 = params["b3"].reshape(32, 1)
    b4 = params["b4"].reshape(1, 1)

    weight_bytes = sum(int(v.size) * v.dtype.itemsize
                       for v in (w1, b1, w2, b2, w3, b3, w4, b4))
    cost = pl.CostEstimate(
        flops=2 * n_pad * (14 * 64 + 64 * 64 + 64 * 32 + 32),
        transcendentals=0,
        bytes_accessed=n_pad * (14 + 1) * 4 + weight_bytes,
    )

    # Weights/biases: constant index_map -> DMA'd once, VMEM-resident.
    const = lambda shape: pl.BlockSpec(shape, lambda i: (0, 0))

    out = pl.pallas_call(
        functools.partial(mlp_kernel, compute_dtype=cd),
        out_shape=jax.ShapeDtypeStruct((1, n_pad), jnp.float32),
        grid_spec=pltpu.PrefetchScalarGridSpec(
            num_scalar_prefetch=0,
            grid=(num_tiles,),
            in_specs=[
                pl.BlockSpec((14, tile), lambda i: (0, i)),   # x batch tile
                const((64, 14)), const((64, 1)),
                const((64, 64)), const((64, 1)),
                const((32, 64)), const((32, 1)),
                const((32, 1)),  const((1, 1)),
            ],
            out_specs=pl.BlockSpec((1, tile), lambda i: (0, i)),
        ),
        compiler_params=pltpu.CompilerParams(
            dimension_semantics=("parallel",),     # megacore sharding on v7x
        ),
        cost_estimate=cost,
    )(xt, w1, b1, w2, b2, w3, b3, w4, b4)

    return out[0, :n].reshape(n, 1)


def init_params(key):
    """Deterministic init mimicking PyTorch Linear defaults
    (uniform +/- 1/sqrt(fan_in)). Weights kept in PyTorch [out, in] layout."""
    dims = [(64, 14), (64, 64), (32, 64), (1, 32)]   # (out, in)
    params = {}
    keys = jax.random.split(key, 2 * len(dims))
    for i, (fan_out, fan_in) in enumerate(dims):
        bound = 1.0 / jnp.sqrt(float(fan_in))
        params[f"w{i + 1}"] = jax.random.uniform(
            keys[2 * i], (fan_out, fan_in),
            minval=-bound, maxval=bound, dtype=jnp.float32)
        params[f"b{i + 1}"] = jax.random.uniform(
            keys[2 * i + 1], (fan_out,),
            minval=-bound, maxval=bound, dtype=jnp.float32)
    return params


def reference_forward(x, params):
    h = jnp.maximum(x @ params["w1"].T + params["b1"], 0.0)
    h = jnp.maximum(h @ params["w2"].T + params["b2"], 0.0)
    h = jnp.maximum(h @ params["w3"].T + params["b3"], 0.0)
    return h @ params["w4"].T + params["b4"]


if __name__ == "__main__":
    key = jax.random.PRNGKey(0)
    k_params, k_x1, k_x2 = jax.random.split(key, 3)

    params = init_params(k_params)

    fwd_f32 = jax.jit(functools.partial(
        boston_model_forward, tile_m=2048, compute_dtype=jnp.float32))
    fwd_bf16 = jax.jit(functools.partial(
        boston_model_forward, tile_m=2048, compute_dtype=jnp.bfloat16))

    # 1) Small batch (matches the original demo): single 128-lane tile, f32.
    x_small = jax.random.normal(k_x1, (8, 14), dtype=jnp.float32)
    out_small = jax.block_until_ready(fwd_f32(x_small, params))
    ref_small = reference_forward(x_small, params)
    assert out_small.shape == (8, 1)
    assert jnp.allclose(out_small, ref_small, atol=1e-5, rtol=1e-5), \
        "f32 small-batch mismatch vs JAX reference"

    # 2) Larger batch: 2 pipelined grid steps (512 lanes each) + tail padding.
    x_big = jax.random.normal(k_x2, (1000, 14), dtype=jnp.float32)
    out_big = jax.block_until_ready(fwd_f32(x_big, params))
    ref_big = reference_forward(x_big, params)
    assert out_big.shape == (1000, 1)
    assert jnp.allclose(out_big, ref_big, atol=1e-4, rtol=1e-4), \
        "f32 tiled-batch mismatch vs JAX reference"

    # 3) bf16 MXU-input fast path (layers 2-3); valid on v5e/v6e/v7x.
    out_bf16 = jax.block_until_ready(fwd_bf16(x_big, params))
    assert out_bf16.shape == (1000, 1)
    assert jnp.allclose(out_bf16, ref_big, atol=5e-2, rtol=5e-2), \
        "bf16 path mismatch vs f32 reference"

    print("KERNEL_OK")
</pallas_src>

<mosaic_0001>
module attributes {stable_mosaic.version = 11 : i64} {
  func.func @mlp_kernel(%arg0: i32, %arg1: memref<14x128xf32, #tpu.memory_space<vmem>>, %arg2: memref<64x14xf32, #tpu.memory_space<vmem>>, %arg3: memref<64x1xf32, #tpu.memory_space<vmem>>, %arg4: memref<64x64xf32, #tpu.memory_space<vmem>>, %arg5: memref<64x1xf32, #tpu.memory_space<vmem>>, %arg6: memref<32x64xf32, #tpu.memory_space<vmem>>, %arg7: memref<32x1xf32, #tpu.memory_space<vmem>>, %arg8: memref<32x1xf32, #tpu.memory_space<vmem>>, %arg9: memref<1x1xf32, #tpu.memory_space<vmem>>, %arg10: memref<1x128xf32, #tpu.memory_space<vmem>>) attributes {dimension_semantics = [#tpu.dimension_semantics<parallel>], iteration_bounds = array<i64: 1>, scalar_prefetch = 0 : i64, scratch_operands = 0 : i64, tpu.core_type = #tpu.core_type<tc>, window_params = [{transform_indices = @transform_0, window_bounds = array<i64: 14, 128>}, {pipeline_mode = #tpu.pipeline_mode<synchronous>, transform_indices = @transform_1, window_bounds = array<i64: 64, 14>}, {pipeline_mode = #tpu.pipeline_mode<synchronous>, transform_indices = @transform_2, window_bounds = array<i64: 64, 1>}, {pipeline_mode = #tpu.pipeline_mode<synchronous>, transform_indices = @transform_3, window_bounds = array<i64: 64, 64>}, {pipeline_mode = #tpu.pipeline_mode<synchronous>, transform_indices = @transform_4, window_bounds = array<i64: 64, 1>}, {pipeline_mode = #tpu.pipeline_mode<synchronous>, transform_indices = @transform_5, window_bounds = array<i64: 32, 64>}, {pipeline_mode = #tpu.pipeline_mode<synchronous>, transform_indices = @transform_6, window_bounds = array<i64: 32, 1>}, {pipeline_mode = #tpu.pipeline_mode<synchronous>, transform_indices = @transform_7, window_bounds = array<i64: 32, 1>}, {pipeline_mode = #tpu.pipeline_mode<synchronous>, transform_indices = @transform_8, window_bounds = array<i64: 1, 1>}, {transform_indices = @transform_9, window_bounds = array<i64: 1, 128>}]} {
    %c0 = arith.constant 0 : index
    %c0_0 = arith.constant 0 : index
    %0 = vector.load %arg2[%c0, %c0_0] : memref<64x14xf32, #tpu.memory_space<vmem>>, vector<64x14xf32>
    %c0_1 = arith.constant 0 : index
    %c0_2 = arith.constant 0 : index
    %1 = vector.load %arg1[%c0_1, %c0_2] : memref<14x128xf32, #tpu.memory_space<vmem>>, vector<14x128xf32>
    %cst = arith.constant dense<0.000000e+00> : vector<64x128xf32>
    %2 = tpu.matmul %0, %1, %cst {dimension_numbers = #tpu.dot_dimension_numbers<[1], [0], [0], [1], [0, 0, 1, 1], [], []>} : vector<64x14xf32>, vector<14x128xf32>, vector<64x128xf32> -> vector<64x128xf32>
    %c0_3 = arith.constant 0 : index
    %c0_4 = arith.constant 0 : index
    %3 = vector.load %arg3[%c0_3, %c0_4] : memref<64x1xf32, #tpu.memory_space<vmem>>, vector<64x1xf32>
    %4 = vector.broadcast %3 : vector<64x1xf32> to vector<64x128xf32>
    %5 = arith.addf %2, %4 : vector<64x128xf32>
    %cst_5 = arith.constant 0.000000e+00 : f32
    %6 = vector.broadcast %cst_5 : f32 to vector<64x128xf32>
    %7 = arith.maximumf %5, %6 : vector<64x128xf32>
    %c0_6 = arith.constant 0 : index
    %c0_7 = arith.constant 0 : index
    %8 = vector.load %arg4[%c0_6, %c0_7] : memref<64x64xf32, #tpu.memory_space<vmem>>, vector<64x64xf32>
    %cst_8 = arith.constant dense<0.000000e+00> : vector<64x128xf32>
    %9 = tpu.matmul %8, %7, %cst_8 {dimension_numbers = #tpu.dot_dimension_numbers<[1], [0], [0], [1], [0, 0, 1, 1], [], []>} : vector<64x64xf32>, vector<64x128xf32>, vector<64x128xf32> -> vector<64x128xf32>
    %c0_9 = arith.constant 0 : index
    %c0_10 = arith.constant 0 : index
    %10 = vector.load %arg5[%c0_9, %c0_10] : memref<64x1xf32, #tpu.memory_space<vmem>>, vector<64x1xf32>
    %11 = vector.broadcast %10 : vector<64x1xf32> to vector<64x128xf32>
    %12 = arith.addf %9, %11 : vector<64x128xf32>
    %cst_11 = arith.constant 0.000000e+00 : f32
    %13 = vector.broadcast %cst_11 : f32 to vector<64x128xf32>
    %14 = arith.maximumf %12, %13 : vector<64x128xf32>
    %c0_12 = arith.constant 0 : index
    %c0_13 = arith.constant 0 : index
    %15 = vector.load %arg6[%c0_12, %c0_13] : memref<32x64xf32, #tpu.memory_space<vmem>>, vector<32x64xf32>
    %cst_14 = arith.constant dense<0.000000e+00> : vector<32x128xf32>
    %16 = tpu.matmul %15, %14, %cst_14 {dimension_numbers = #tpu.dot_dimension_numbers<[1], [0], [0], [1], [0, 0, 1, 1], [], []>} : vector<32x64xf32>, vector<64x128xf32>, vector<32x128xf32> -> vector<32x128xf32>
    %c0_15 = arith.constant 0 : index
    %c0_16 = arith.constant 0 : index
    %17 = vector.load %arg7[%c0_15, %c0_16] : memref<32x1xf32, #tpu.memory_space<vmem>>, vector<32x1xf32>
    %18 = vector.broadcast %17 : vector<32x1xf32> to vector<32x128xf32>
    %19 = arith.addf %16, %18 : vector<32x128xf32>
    %cst_17 = arith.constant 0.000000e+00 : f32
    %20 = vector.broadcast %cst_17 : f32 to vector<32x128xf32>
    %21 = arith.maximumf %19, %20 : vector<32x128xf32>
    %c0_18 = arith.constant 0 : index
    %c0_19 = arith.constant 0 : index
    %22 = vector.load %arg8[%c0_18, %c0_19] : memref<32x1xf32, #tpu.memory_space<vmem>>, vector<32x1xf32>
    %23 = vector.broadcast %22 : vector<32x1xf32> to vector<32x128xf32>
    %24 = arith.mulf %21, %23 : vector<32x128xf32>
    %cst_20 = arith.constant dense<0.000000e+00> : vector<128xf32>
    %25 = vector.multi_reduction <add>, %24, %cst_20 [0] : vector<32x128xf32> to vector<128xf32>
    %26 = vector.shape_cast %25 : vector<128xf32> to vector<1x128xf32>
    %c0_21 = arith.constant 0 : index
    %c0_22 = arith.constant 0 : index
    %27 = vector.load %arg9[%c0_21, %c0_22] : memref<1x1xf32, #tpu.memory_space<vmem>>, vector<1x1xf32>
    %28 = vector.broadcast %27 : vector<1x1xf32> to vector<1x128xf32>
    %29 = arith.addf %26, %28 : vector<1x128xf32>
    %c0_23 = arith.constant 0 : index
    %c0_24 = arith.constant 0 : index
    %30 = vector.load %arg10[%c0_23, %c0_24] : memref<1x128xf32, #tpu.memory_space<vmem>>, vector<1x128xf32>
    tpu.vector_store %arg10[%c0_23, %c0_24], %29 {strides = array<i32>} : memref<1x128xf32, #tpu.memory_space<vmem>>, vector<1x128xf32>,
    return
  }
  func.func @transform_0(%arg0: i32) -> (i32, i32) {
    %c0_i32 = arith.constant 0 : i32
    %c0_i32_0 = arith.constant 0 : i32
    return %c0_i32, %arg0 : i32, i32
  }
  func.func @transform_1(%arg0: i32) -> (i32, i32) {
    %c0_i32 = arith.constant 0 : i32
    %c0_i32_0 = arith.constant 0 : i32
    %c0_i32_1 = arith.constant 0 : i32
    return %c0_i32, %c0_i32_0 : i32, i32
  }
  func.func @transform_2(%arg0: i32) -> (i32, i32) {
    %c0_i32 = arith.constant 0 : i32
    %c0_i32_0 = arith.constant 0 : i32
    %c0_i32_1 = arith.constant 0 : i32
    return %c0_i32, %c0_i32_0 : i32, i32
  }
  func.func @transform_3(%arg0: i32) -> (i32, i32) {
    %c0_i32 = arith.constant 0 : i32
    %c0_i32_0 = arith.constant 0 : i32
    %c0_i32_1 = arith.constant 0 : i32
    return %c0_i32, %c0_i32_0 : i32, i32
  }
  func.func @transform_4(%arg0: i32) -> (i32, i32) {
    %c0_i32 = arith.constant 0 : i32
    %c0_i32_0 = arith.constant 0 : i32
    %c0_i32_1 = arith.constant 0 : i32
    return %c0_i32, %c0_i32_0 : i32, i32
  }
  func.func @transform_5(%arg0: i32) -> (i32, i32) {
    %c0_i32 = arith.constant 0 : i32
    %c0_i32_0 = arith.constant 0 : i32
    %c0_i32_1 = arith.constant 0 : i32
    return %c0_i32, %c0_i32_0 : i32, i32
  }
  func.func @transform_6(%arg0: i32) -> (i32, i32) {
    %c0_i32 = arith.constant 0 : i32
    %c0_i32_0 = arith.constant 0 : i32
    %c0_i32_1 = arith.constant 0 : i32
    return %c0_i32, %c0_i32_0 : i32, i32
  }
  func.func @transform_7(%arg0: i32) -> (i32, i32) {
    %c0_i32 = arith.constant 0 : i32
    %c0_i32_0 = arith.constant 0 : i32
    %c0_i32_1 = arith.constant 0 : i32
    return %c0_i32, %c0_i32_0 : i32, i32
  }
  func.func @transform_8(%arg0: i32) -> (i32, i32) {
    %c0_i32 = arith.constant 0 : i32
    %c0_i32_0 = arith.constant 0 : i32
    %c0_i32_1 = arith.constant 0 : i32
    return %c0_i32, %c0_i32_0 : i32, i32
  }
  func.func @transform_9(%arg0: i32) -> (i32, i32) {
    %c0_i32 = arith.constant 0 : i32
    %c0_i32_0 = arith.constant 0 : i32
    return %c0_i32, %arg0 : i32, i32
  }
}

</mosaic_0001>

<llo_original>
// kernel: boston_model_forward.1
$region0: #{boston_model_forward.1}
  #allocation0 [shape = 'u32[]', space=smem, size = 0x4, offset = 0x4, fixed_abs, tag = 'smem constant byte address 0x4 - core index']
  #allocation1 [shape = 'u32[144,128]{1,0:T(1,128)}', space=vmem, size = 0x12000, scoped, tag = 'internal scratch']
  #allocation2 [shape = 'f32[1,1]{1,0:T(1,128)S(1)}', space=vmem, size = 0x200, scoped, tag = 'scoped memory for boston_model_forward.1']
  %s0 = inlined_call_operand.vmem [shape: f32[14,128], index: 0, kind: input, shape index: {}]
  %s1 = inlined_call_operand.vmem [shape: f32[64,14], index: 1, kind: input, shape index: {}]
  %s2 = inlined_call_operand.vmem [shape: f32[64,1], index: 2, kind: input, shape index: {}]
  %s3 = inlined_call_operand.vmem [shape: f32[64,64], index: 3, kind: input, shape index: {}]
  %s4 = inlined_call_operand.vmem [shape: f32[64,1], index: 4, kind: input, shape index: {}]
  %s5 = inlined_call_operand.vmem [shape: f32[32,64], index: 5, kind: input, shape index: {}]
  %s6 = inlined_call_operand.vmem [shape: f32[32,1], index: 6, kind: input, shape index: {}]
  %s7 = inlined_call_operand.vmem [shape: f32[32,1], index: 7, kind: input, shape index: {}]
  %s8 = inlined_call_operand.<no memory space> [shape: f32[1,1], index: 8, kind: input, shape index: {}]
  %s9 = inlined_call_operand.vmem [shape: f32[1,128], index: 9, kind: output, shape index: {}]
  %s10 = sld [smem:[#allocation0]]
  $region46: #{boston_model_forward.1} parent=0
    _
  %s12 = ssub.s32 1, %s10
  %s13 = scalar_select 0, %s12, %s10
  %v14 = vstv %s8
  %15 = vst [vmem:[#allocation2] sm:$0x1] %v14
  // Predicated region
  $region2: #{boston_model_forward.1} parent=0 // pred_check
    _
  $region3: #{boston_model_forward.1} parent=0 // pred_check_branch
    %17 = sbr.rel (0) target = $region5
  $region4: #{boston_model_forward.1} parent=0 // pred_region
    _
  $region5: #{boston_model_forward.1} parent=0 // pred_fallthru
    _
  // Predicated region
  $region6: #{boston_model_forward.1} parent=0 // pred_check
    _
  $region7: #{boston_model_forward.1} parent=0 // pred_check_branch
    %19 = sbr.rel (0) target = $region9
  $region8: #{boston_model_forward.1} parent=0 // pred_region
    _
  $region9: #{boston_model_forward.1} parent=0 // pred_fallthru
    _
  // Predicated region
  $region10: #{boston_model_forward.1} parent=0 // pred_check
    _
  $region11: #{boston_model_forward.1} parent=0 // pred_check_branch
    %21 = sbr.rel (0) target = $region13
  $region12: #{boston_model_forward.1} parent=0 // pred_region
    _
  $region13: #{boston_model_forward.1} parent=0 // pred_fallthru
    _
  // Predicated region
  $region14: #{boston_model_forward.1} parent=0 // pred_check
    _
  $region15: #{boston_model_forward.1} parent=0 // pred_check_branch
    %23 = sbr.rel (0) target = $region17
  $region16: #{boston_model_forward.1} parent=0 // pred_region
    _
  $region17: #{boston_model_forward.1} parent=0 // pred_fallthru
    _
  // Predicated region
  $region18: #{boston_model_forward.1} parent=0 // pred_check
    _
  $region19: #{boston_model_forward.1} parent=0 // pred_check_branch
    %25 = sbr.rel (0) target = $region21
  $region20: #{boston_model_forward.1} parent=0 // pred_region
    _
  $region21: #{boston_model_forward.1} parent=0 // pred_fallthru
    _
  // Predicated region
  $region22: #{boston_model_forward.1} parent=0 // pred_check
    _
  $region23: #{boston_model_forward.1} parent=0 // pred_check_branch
    %27 = sbr.rel (0) target = $region25
  $region24: #{boston_model_forward.1} parent=0 // pred_region
    _
  $region25: #{boston_model_forward.1} parent=0 // pred_fallthru
    _
  // Predicated region
  $region26: #{boston_model_forward.1} parent=0 // pred_check
    _
  $region27: #{boston_model_forward.1} parent=0 // pred_check_branch
    %29 = sbr.rel (0) target = $region29
  $region28: #{boston_model_forward.1} parent=0 // pred_region
    _
  $region29: #{boston_model_forward.1} parent=0 // pred_fallthru
    _
  // Predicated region
  $region30: #{boston_model_forward.1} parent=0 // pred_check
    _
  $region31: #{boston_model_forward.1} parent=0 // pred_check_branch
    %31 = sbr.rel (0) target = $region33
  $region32: #{boston_model_forward.1} parent=0 // pred_region
    _
  $region33: #{boston_model_forward.1} parent=0 // pred_fallthru
    _
  // Predicated region
  $region34: #{boston_model_forward.1} parent=0 // pred_check
    _
  $region35: #{boston_model_forward.1} parent=0 // pred_check_branch
    %33 = sbr.rel (0) target = $region37
  $region36: #{boston_model_forward.1} parent=0 // pred_region
    _
  $region37: #{boston_model_forward.1} parent=0 // pred_fallthru
    _
  %v34 = vld [vmem:[%s1] sm:$0xff]
  %v35 = vld [vmem:[%s1 + $0x8] sm:$0xff]
  %v36 = vld [vmem:[%s1 + $0x10] sm:$0xff]
  %v37 = vld [vmem:[%s1 + $0x18] sm:$0xff]
  %v38 = vld [vmem:[%s1 + $0x20] sm:$0xff]
  %v39 = vld [vmem:[%s1 + $0x28] sm:$0xff]
  %v40 = vld [vmem:[%s1 + $0x30] sm:$0xff]
  %v41 = vld [vmem:[%s1 + $0x38] sm:$0xff]
  %v42 = vld [vmem:[%s0] sm:$0xff]
  %v43 = vld [vmem:[%s0 + $0x8] sm:$0x3f]
  %v44 = vld [vmem:[%s2] sm:$0xff]
  %v45 = vld [vmem:[%s2 + $0x8] sm:$0xff]
  %v46 = vld [vmem:[%s2 + $0x10] sm:$0xff]
  %v47 = vld [vmem:[%s2 + $0x18] sm:$0xff]
  %v48 = vld [vmem:[%s2 + $0x20] sm:$0xff]
  %v49 = vld [vmem:[%s2 + $0x28] sm:$0xff]
  %v50 = vld [vmem:[%s2 + $0x30] sm:$0xff]
  %v51 = vld [vmem:[%s2 + $0x38] sm:$0xff]
  %53 = vset.pattern.permute.xlu0 0
  %54 = vperm.xlu0 %53, %v44
  %v55 = vpop.permute.xlu0 %54
  %58 = vset.pattern.permute.xlu0 0
  %59 = vperm.xlu0 %58, %v45
  %v60 = vpop.permute.xlu0 %59
  %63 = vset.pattern.permute.xlu0 0
  %64 = vperm.xlu0 %63, %v46
  %v65 = vpop.permute.xlu0 %64
  %68 = vset.pattern.permute.xlu0 0
  %69 = vperm.xlu0 %68, %v47
  %v70 = vpop.permute.xlu0 %69
  %73 = vset.pattern.permute.xlu0 0
  %74 = vperm.xlu0 %73, %v48
  %v75 = vpop.permute.xlu0 %74
  %78 = vset.pattern.permute.xlu0 0
  %79 = vperm.xlu0 %78, %v49
  %v80 = vpop.permute.xlu0 %79
  %83 = vset.pattern.permute.xlu0 0
  %84 = vperm.xlu0 %83, %v50
  %v85 = vpop.permute.xlu0 %84
  %88 = vset.pattern.permute.xlu0 0
  %89 = vperm.xlu0 %88, %v51
  %v90 = vpop.permute.xlu0 %89
  %vm92 = vcmask 113664
  %v94 = vsel %vm92, %v34, 0
  %v97 = vsel %vm92, %v35, 0
  %v100 = vsel %vm92, %v36, 0
  %v103 = vsel %vm92, %v37, 0
  %v106 = vsel %vm92, %v38, 0
  %v109 = vsel %vm92, %v39, 0
  %v112 = vsel %vm92, %v40, 0
  %v115 = vsel %vm92, %v41, 0
  %vm117 = vcmask 1045504
  %v119 = vsel %vm117, %v43, 0
  %121 = vmatprep.subr.mxu0 0.0
  %122 = vmatpush1.msra.mxu0 %v42
  %123 = vmatprep.subr.mxu0 0.0
  %124 = vmatpush1.msra.mxu0 %v119
  %125 = vmatprep.subr.mxu0 0.0
  %126 = vmatpush1.msra.mxu0 0.0
  %127 = vmatprep.subr.mxu0 0.0
  %128 = vmatpush1.msra.mxu0 0.0
  %129 = vmatprep.subr.mxu0 0.0
  %130 = vmatpush1.msra.mxu0 0.0
  %131 = vmatprep.subr.mxu0 0.0
  %132 = vmatpush1.msra.mxu0 0.0
  %133 = vmatprep.subr.mxu0 0.0
  %134 = vmatpush1.msra.mxu0 0.0
  %135 = vmatprep.subr.mxu0 0.0
  %136 = vmatpush1.msra.mxu0 0.0
  %137 = vmatprep.subr.mxu0 0.0
  %138 = vmatpush1.msra.mxu0 0.0
  %139 = vmatprep.subr.mxu0 0.0
  %140 = vmatpush1.msra.mxu0 0.0
  %141 = vmatprep.subr.mxu0 0.0
  %142 = vmatpush1.msra.mxu0 0.0
  %143 = vmatprep.subr.mxu0 0.0
  %144 = vmatpush1.msra.mxu0 0.0
  %145 = vmatprep.subr.mxu0 0.0
  %146 = vmatpush1.msra.mxu0 0.0
  %147 = vmatprep.subr.mxu0 0.0
  %148 = vmatpush1.msra.mxu0 0.0
  %149 = vmatprep.subr.mxu0 0.0
  %150 = vmatpush1.msra.mxu0 0.0
  %151 = vmatprep.subr.mxu0 0.0
  %152 = vmatpush1.msra.mxu0 0.0
  %153 = vmatprep.subr.mxu0 0.0
  %154 = vmatpush1.msra.mxu0 0.0
  %155 = vmatprep.subr.mxu0 0.0
  %156 = vmatpush1.msra.mxu0 0.0
  %157 = vmatprep.subr.mxu0 0.0
  %158 = vmatpush1.msra.mxu0 0.0
  %159 = vmatprep.subr.mxu0 0.0
  %160 = vmatpush1.msra.mxu0 0.0
  %161 = vmatprep.subr.mxu0 0.0
  %162 = vmatpush1.msra.mxu0 0.0
  %163 = vmatprep.subr.mxu0 0.0
  %164 = vmatpush1.msra.mxu0 0.0
  %165 = vmatprep.subr.mxu0 0.0
  %166 = vmatpush1.msra.mxu0 0.0
  %167 = vmatprep.subr.mxu0 0.0
  %168 = vmatpush1.msra.mxu0 0.0
  %169 = vmatprep.subr.mxu0 0.0
  %170 = vmatpush1.msra.mxu0 0.0
  %171 = vmatprep.subr.mxu0 0.0
  %172 = vmatpush1.msra.mxu0 0.0
  %173 = vmatprep.subr.mxu0 0.0
  %174 = vmatpush1.msra.mxu0 0.0
  %175 = vmatprep.subr.mxu0 0.0
  %176 = vmatpush1.msra.mxu0 0.0
  %177 = vmatprep.subr.mxu0 0.0
  %178 = vmatpush1.msra.mxu0 0.0
  %179 = vmatprep.subr.mxu0 0.0
  %180 = vmatpush1.msra.mxu0 0.0
  %181 = vmatprep.subr.mxu0 0.0
  %182 = vmatpush1.msra.mxu0 0.0
  %183 = vmatprep.subr.mxu0 0.0
  %184 = vmatpush1.msra.mxu0 0.0
  %185 = vmatprep.mubr.f32.mxu0 0.0
  %186 = vmatmul.mubr.f32.gmra.mrb[0].mxu0 %v94
  %v187 = vpop.f32.mrb[0].mxu0
  %v188 = vadd.f32 %v55, %v187
  %v189 = vpop.f32.mrb[0].mxu0
  %190 = vmatprep.mubr.f32.mxu0 0.0
  %191 = vmatmul.mubr.f32.gmra.mrb[0].mxu0 %v97
  %v192 = vpop.f32.mrb[0].mxu0
  %v193 = vadd.f32 %v60, %v192
  %v194 = vpop.f32.mrb[0].mxu0
  %195 = vmatprep.mubr.f32.mxu0 0.0
  %196 = vmatmul.mubr.f32.gmra.mrb[0].mxu0 %v100
  %v197 = vpop.f32.mrb[0].mxu0
  %v198 = vadd.f32 %v65, %v197
  %v199 = vpop.f32.mrb[0].mxu0
  %200 = vmatprep.mubr.f32.mxu0 0.0
  %201 = vmatmul.mubr.f32.gmra.mrb[0].mxu0 %v103
  %v202 = vpop.f32.mrb[0].mxu0
  %v203 = vadd.f32 %v70, %v202
  %v204 = vpop.f32.mrb[0].mxu0
  %205 = vmatprep.mubr.f32.mxu0 0.0
  %206 = vmatmul.mubr.f32.gmra.mrb[0].mxu0 %v106
  %v207 = vpop.f32.mrb[0].mxu0
  %v208 = vadd.f32 %v75, %v207
  %v209 = vpop.f32.mrb[0].mxu0
  %210 = vmatprep.mubr.f32.mxu0 0.0
  %211 = vmatmul.mubr.f32.gmra.mrb[0].mxu0 %v109
  %v212 = vpop.f32.mrb[0].mxu0
  %v213 = vadd.f32 %v80, %v212
  %v214 = vpop.f32.mrb[0].mxu0
  %215 = vmatprep.mubr.f32.mxu0 0.0
  %216 = vmatmul.mubr.f32.gmra.mrb[0].mxu0 %v112
  %v217 = vpop.f32.mrb[0].mxu0
  %v218 = vadd.f32 %v85, %v217
  %v219 = vpop.f32.mrb[0].mxu0
  %220 = vmatprep.mubr.f32.mxu0 0.0
  %221 = vmatmul.mubr.f32.gmra.mrb[0].mxu0 %v115
  %v222 = vpop.f32.mrb[0].mxu0
  %v223 = vadd.f32 %v90, %v222
  %v224 = vpop.f32.mrb[0].mxu0
  %225 = vdwg.mxu0
  %v226 = vmax.f32 %v188, 0.0
  %v227 = vmax.f32 %v193, 0.0
  %v228 = vmax.f32 %v198, 0.0
  %v229 = vmax.f32 %v203, 0.0
  %v230 = vmax.f32 %v208, 0.0
  %v231 = vmax.f32 %v213, 0.0
  %v232 = vmax.f32 %v218, 0.0
  %v233 = vmax.f32 %v223, 0.0
  %v234 = vld [vmem:[%s3] sm:$0xff]
  %v235 = vld [vmem:[%s3 + $0x8] sm:$0xff]
  %v236 = vld [vmem:[%s3 + $0x10] sm:$0xff]
  %v237 = vld [vmem:[%s3 + $0x18] sm:$0xff]
  %v238 = vld [vmem:[%s3 + $0x20] sm:$0xff]
  %v239 = vld [vmem:[%s3 + $0x28] sm:$0xff]
  %v240 = vld [vmem:[%s3 + $0x30] sm:$0xff]
  %v241 = vld [vmem:[%s3 + $0x38] sm:$0xff]
  %v242 = vld [vmem:[%s4] sm:$0xff]
  %v243 = vld [vmem:[%s4 + $0x8] sm:$0xff]
  %v244 = vld [vmem:[%s4 + $0x10] sm:$0xff]
  %v245 = vld [vmem:[%s4 + $0x18] sm:$0xff]
  %v246 = vld [vmem:[%s4 + $0x20] sm:$0xff]
  %v247 = vld [vmem:[%s4 + $0x28] sm:$0xff]
  %v248 = vld [vmem:[%s4 + $0x30] sm:$0xff]
  %v249 = vld [vmem:[%s4 + $0x38] sm:$0xff]
  %251 = vset.pattern.permute.xlu0 0
  %252 = vperm.xlu0 %251, %v242
  %v253 = vpop.permute.xlu0 %252
  %256 = vset.pattern.permute.xlu0 0
  %257 = vperm.xlu0 %256, %v243
  %v258 = vpop.permute.xlu0 %257
  %261 = vset.pattern.permute.xlu0 0
  %262 = vperm.xlu0 %261, %v244
  %v263 = vpop.permute.xlu0 %262
  %266 = vset.pattern.permute.xlu0 0
  %267 = vperm.xlu0 %266, %v245
  %v268 = vpop.permute.xlu0 %267
  %271 = vset.pattern.permute.xlu0 0
  %272 = vperm.xlu0 %271, %v246
  %v273 = vpop.permute.xlu0 %272
  %276 = vset.pattern.permute.xlu0 0
  %277 = vperm.xlu0 %276, %v247
  %v278 = vpop.permute.xlu0 %277
  %281 = vset.pattern.permute.xlu0 0
  %282 = vperm.xlu0 %281, %v248
  %v283 = vpop.permute.xlu0 %282
  %286 = vset.pattern.permute.xlu0 0
  %287 = vperm.xlu0 %286, %v249
  %v288 = vpop.permute.xlu0 %287
  %vm290 = vcmask 523264
  %v292 = vsel %vm290, %v234, 0
  %v295 = vsel %vm290, %v235, 0
  %v298 = vsel %vm290, %v236, 0
  %v301 = vsel %vm290, %v237, 0
  %v304 = vsel %vm290, %v238, 0
  %v307 = vsel %vm290, %v239, 0
  %v310 = vsel %vm290, %v240, 0
  %v313 = vsel %vm290, %v241, 0
  %315 = vmatprep.subr.mxu0 0.0
  %316 = vmatpush1.msra.mxu0 %v226
  %317 = vmatprep.subr.mxu0 0.0
  %318 = vmatpush1.msra.mxu0 %v227
  %319 = vmatprep.subr.mxu0 0.0
  %320 = vmatpush1.msra.mxu0 %v228
  %321 = vmatprep.subr.mxu0 0.0
  %322 = vmatpush1.msra.mxu0 %v229
  %323 = vmatprep.subr.mxu0 0.0
  %324 = vmatpush1.msra.mxu0 %v230
  %325 = vmatprep.subr.mxu0 0.0
  %326 = vmatpush1.msra.mxu0 %v231
  %327 = vmatprep.subr.mxu0 0.0
  %328 = vmatpush1.msra.mxu0 %v232
  %329 = vmatprep.subr.mxu0 0.0
  %330 = vmatpush1.msra.mxu0 %v233
  %331 = vmatprep.subr.mxu0 0.0
  %332 = vmatpush1.msra.mxu0 0.0
  %333 = vmatprep.subr.mxu0 0.0
  %334 = vmatpush1.msra.mxu0 0.0
  %335 = vmatprep.subr.mxu0 0.0
  %336 = vmatpush1.msra.mxu0 0.0
  %337 = vmatprep.subr.mxu0 0.0
  %338 = vmatpush1.msra.mxu0 0.0
  %339 = vmatprep.subr.mxu0 0.0
  %340 = vmatpush1.msra.mxu0 0.0
  %341 = vmatprep.subr.mxu0 0.0
  %342 = vmatpush1.msra.mxu0 0.0
  %343 = vmatprep.subr.mxu0 0.0
  %344 = vmatpush1.msra.mxu0 0.0
  %345 = vmatprep.subr.mxu0 0.0
  %346 = vmatpush1.msra.mxu0 0.0
  %347 = vmatprep.subr.mxu0 0.0
  %348 = vmatpush1.msra.mxu0 0.0
  %349 = vmatprep.subr.mxu0 0.0
  %350 = vmatpush1.msra.mxu0 0.0
  %351 = vmatprep.subr.mxu0 0.0
  %352 = vmatpush1.msra.mxu0 0.0
  %353 = vmatprep.subr.mxu0 0.0
  %354 = vmatpush1.msra.mxu0 0.0
  %355 = vmatprep.subr.mxu0 0.0
  %356 = vmatpush1.msra.mxu0 0.0
  %357 = vmatprep.subr.mxu0 0.0
  %358 = vmatpush1.msra.mxu0 0.0
  %359 = vmatprep.subr.mxu0 0.0
  %360 = vmatpush1.msra.mxu0 0.0
  %361 = vmatprep.subr.mxu0 0.0
  %362 = vmatpush1.msra.mxu0 0.0
  %363 = vmatprep.subr.mxu0 0.0
  %364 = vmatpush1.msra.mxu0 0.0
  %365 = vmatprep.subr.mxu0 0.0
  %366 = vmatpush1.msra.mxu0 0.0
  %367 = vmatprep.subr.mxu0 0.0
  %368 = vmatpush1.msra.mxu0 0.0
  %369 = vmatprep.subr.mxu0 0.0
  %370 = vmatpush1.msra.mxu0 0.0
  %371 = vmatprep.subr.mxu0 0.0
  %372 = vmatpush1.msra.mxu0 0.0
  %373 = vmatprep.subr.mxu0 0.0
  %374 = vmatpush1.msra.mxu0 0.0
  %375 = vmatprep.subr.mxu0 0.0
  %376 = vmatpush1.msra.mxu0 0.0
  %377 = vmatprep.subr.mxu0 0.0
  %378 = vmatpush1.msra.mxu0 0.0
  %379 = vmatprep.mubr.f32.mxu0 0.0
  %380 = vmatmul.mubr.f32.gmra.mrb[0].mxu0 %v292
  %v381 = vpop.f32.mrb[0].mxu0
  %v382 = vadd.f32 %v253, %v381
  %v383 = vpop.f32.mrb[0].mxu0
  %384 = vmatprep.mubr.f32.mxu0 0.0
  %385 = vmatmul.mubr.f32.gmra.mrb[0].mxu0 %v295
  %v386 = vpop.f32.mrb[0].mxu0
  %v387 = vadd.f32 %v258, %v386
  %v388 = vpop.f32.mrb[0].mxu0
  %389 = vmatprep.mubr.f32.mxu0 0.0
  %390 = vmatmul.mubr.f32.gmra.mrb[0].mxu0 %v298
  %v391 = vpop.f32.mrb[0].mxu0
  %v392 = vadd.f32 %v263, %v391
  %v393 = vpop.f32.mrb[0].mxu0
  %394 = vmatprep.mubr.f32.mxu0 0.0
  %395 = vmatmul.mubr.f32.gmra.mrb[0].mxu0 %v301
  %v396 = vpop.f32.mrb[0].mxu0
  %v397 = vadd.f32 %v268, %v396
  %v398 = vpop.f32.mrb[0].mxu0
  %399 = vmatprep.mubr.f32.mxu0 0.0
  %400 = vmatmul.mubr.f32.gmra.mrb[0].mxu0 %v304
  %v401 = vpop.f32.mrb[0].mxu0
  %v402 = vadd.f32 %v273, %v401
  %v403 = vpop.f32.mrb[0].mxu0
  %404 = vmatprep.mubr.f32.mxu0 0.0
  %405 = vmatmul.mubr.f32.gmra.mrb[0].mxu0 %v307
  %v406 = vpop.f32.mrb[0].mxu0
  %v407 = vadd.f32 %v278, %v406
  %v408 = vpop.f32.mrb[0].mxu0
  %409 = vmatprep.mubr.f32.mxu0 0.0
  %410 = vmatmul.mubr.f32.gmra.mrb[0].mxu0 %v310
  %v411 = vpop.f32.mrb[0].mxu0
  %v412 = vadd.f32 %v283, %v411
  %v413 = vpop.f32.mrb[0].mxu0
  %414 = vmatprep.mubr.f32.mxu0 0.0
  %415 = vmatmul.mubr.f32.gmra.mrb[0].mxu0 %v313
  %v416 = vpop.f32.mrb[0].mxu0
  %v417 = vadd.f32 %v288, %v416
  %v418 = vpop.f32.mrb[0].mxu0
  %419 = vdwg.mxu0
  %v420 = vmax.f32 %v382, 0.0
  %v421 = vmax.f32 %v387, 0.0
  %v422 = vmax.f32 %v392, 0.0
  %v423 = vmax.f32 %v397, 0.0
  %v424 = vmax.f32 %v402, 0.0
  %v425 = vmax.f32 %v407, 0.0
  %v426 = vmax.f32 %v412, 0.0
  %v427 = vmax.f32 %v417, 0.0
  %v428 = vld [vmem:[%s5] sm:$0xff]
  %v429 = vld [vmem:[%s5 + $0x8] sm:$0xff]
  %v430 = vld [vmem:[%s5 + $0x10] sm:$0xff]
  %v431 = vld [vmem:[%s5 + $0x18] sm:$0xff]
  %v432 = vld [vmem:[%s6] sm:$0xff]
  %v433 = vld [vmem:[%s6 + $0x8] sm:$0xff]
  %v434 = vld [vmem:[%s6 + $0x10] sm:$0xff]
  %v435 = vld [vmem:[%s6 + $0x18] sm:$0xff]
  %437 = vset.pattern.permute.xlu0 0
  %438 = vperm.xlu0 %437, %v432
  %v439 = vpop.permute.xlu0 %438
  %442 = vset.pattern.permute.xlu0 0
  %443 = vperm.xlu0 %442, %v433
  %v444 = vpop.permute.xlu0 %443
  %447 = vset.pattern.permute.xlu0 0
  %448 = vperm.xlu0 %447, %v434
  %v449 = vpop.permute.xlu0 %448
  %452 = vset.pattern.permute.xlu0 0
  %453 = vperm.xlu0 %452, %v435
  %v454 = vpop.permute.xlu0 %453
  %v457 = vsel %vm290, %v428, 0
  %v460 = vsel %vm290, %v429, 0
  %v463 = vsel %vm290, %v430, 0
  %v466 = vsel %vm290, %v431, 0
  %468 = vmatprep.subr.mxu0 0.0
  %469 = vmatpush1.msra.mxu0 %v420
  %470 = vmatprep.subr.mxu0 0.0
  %471 = vmatpush1.msra.mxu0 %v421
  %472 = vmatprep.subr.mxu0 0.0
  %473 = vmatpush1.msra.mxu0 %v422
  %474 = vmatprep.subr.mxu0 0.0
  %475 = vmatpush1.msra.mxu0 %v423
  %476 = vmatprep.subr.mxu0 0.0
  %477 = vmatpush1.msra.mxu0 %v424
  %478 = vmatprep.subr.mxu0 0.0
  %479 = vmatpush1.msra.mxu0 %v425
  %480 = vmatprep.subr.mxu0 0.0
  %481 = vmatpush1.msra.mxu0 %v426
  %482 = vmatprep.subr.mxu0 0.0
  %483 = vmatpush1.msra.mxu0 %v427
  %484 = vmatprep.subr.mxu0 0.0
  %485 = vmatpush1.msra.mxu0 0.0
  %486 = vmatprep.subr.mxu0 0.0
  %487 = vmatpush1.msra.mxu0 0.0
  %488 = vmatprep.subr.mxu0 0.0
  %489 = vmatpush1.msra.mxu0 0.0
  %490 = vmatprep.subr.mxu0 0.0
  %491 = vmatpush1.msra.mxu0 0.0
  %492 = vmatprep.subr.mxu0 0.0
  %493 = vmatpush1.msra.mxu0 0.0
  %494 = vmatprep.subr.mxu0 0.0
  %495 = vmatpush1.msra.mxu0 0.0
  %496 = vmatprep.subr.mxu0 0.0
  %497 = vmatpush1.msra.mxu0 0.0
  %498 = vmatprep.subr.mxu0 0.0
  %499 = vmatpush1.msra.mxu0 0.0
  %500 = vmatprep.subr.mxu0 0.0
  %501 = vmatpush1.msra.mxu0 0.0
  %502 = vmatprep.subr.mxu0 0.0
  %503 = vmatpush1.msra.mxu0 0.0
  %504 = vmatprep.subr.mxu0 0.0
  %505 = vmatpush1.msra.mxu0 0.0
  %506 = vmatprep.subr.mxu0 0.0
  %507 = vmatpush1.msra.mxu0 0.0
  %508 = vmatprep.subr.mxu0 0.0
  %509 = vmatpush1.msra.mxu0 0.0
  %510 = vmatprep.subr.mxu0 0.0
  %511 = vmatpush1.msra.mxu0 0.0
  %512 = vmatprep.subr.mxu0 0.0
  %513 = vmatpush1.msra.mxu0 0.0
  %514 = vmatprep.subr.mxu0 0.0
  %515 = vmatpush1.msra.mxu0 0.0
  %516 = vmatprep.subr.mxu0 0.0
  %517 = vmatpush1.msra.mxu0 0.0
  %518 = vmatprep.subr.mxu0 0.0
  %519 = vmatpush1.msra.mxu0 0.0
  %520 = vmatprep.subr.mxu0 0.0
  %521 = vmatpush1.msra.mxu0 0.0
  %522 = vmatprep.subr.mxu0 0.0
  %523 = vmatpush1.msra.mxu0 0.0
  %524 = vmatprep.subr.mxu0 0.0
  %525 = vmatpush1.msra.mxu0 0.0
  %526 = vmatprep.subr.mxu0 0.0
  %527 = vmatpush1.msra.mxu0 0.0
  %528 = vmatprep.subr.mxu0 0.0
  %529 = vmatpush1.msra.mxu0 0.0
  %530 = vmatprep.subr.mxu0 0.0
  %531 = vmatpush1.msra.mxu0 0.0
  %532 = vmatprep.mubr.f32.mxu0 0.0
  %533 = vmatmul.mubr.f32.gmra.mrb[0].mxu0 %v457
  %v534 = vpop.f32.mrb[0].mxu0
  %v535 = vadd.f32 %v439, %v534
  %v536 = vpop.f32.mrb[0].mxu0
  %537 = vmatprep.mubr.f32.mxu0 0.0
  %538 = vmatmul.mubr.f32.gmra.mrb[0].mxu0 %v460
  %v539 = vpop.f32.mrb[0].mxu0
  %v540 = vadd.f32 %v444, %v539
  %v541 = vpop.f32.mrb[0].mxu0
  %542 = vmatprep.mubr.f32.mxu0 0.0
  %543 = vmatmul.mubr.f32.gmra.mrb[0].mxu0 %v463
  %v544 = vpop.f32.mrb[0].mxu0
  %v545 = vadd.f32 %v449, %v544
  %v546 = vpop.f32.mrb[0].mxu0
  %547 = vmatprep.mubr.f32.mxu0 0.0
  %548 = vmatmul.mubr.f32.gmra.mrb[0].mxu0 %v466
  %v549 = vpop.f32.mrb[0].mxu0
  %v550 = vadd.f32 %v454, %v549
  %v551 = vpop.f32.mrb[0].mxu0
  %552 = vdwg.mxu0
  %v553 = vmax.f32 %v535, 0.0
  %v554 = vmax.f32 %v540, 0.0
  %v555 = vmax.f32 %v545, 0.0
  %v556 = vmax.f32 %v550, 0.0
  %v557 = vld [vmem:[%s7] sm:$0xff]
  %v558 = vld [vmem:[%s7 + $0x8] sm:$0xff]
  %v559 = vld [vmem:[%s7 + $0x10] sm:$0xff]
  %v560 = vld [vmem:[%s7 + $0x18] sm:$0xff]
  %562 = vset.pattern.permute.xlu0 0
  %563 = vperm.xlu0 %562, %v557
  %v564 = vpop.permute.xlu0 %563
  %567 = vset.pattern.permute.xlu0 0
  %568 = vperm.xlu0 %567, %v558
  %v569 = vpop.permute.xlu0 %568
  %572 = vset.pattern.permute.xlu0 0
  %573 = vperm.xlu0 %572, %v559
  %v574 = vpop.permute.xlu0 %573
  %577 = vset.pattern.permute.xlu0 0
  %578 = vperm.xlu0 %577, %v560
  %v579 = vpop.permute.xlu0 %578
  %v581 = vmul.f32 %v553, %v564
  %v582 = vmul.f32 %v554, %v569
  %v583 = vmul.f32 %v555, %v574
  %v584 = vmul.f32 %v556, %v579
  %v585 = vadd.f32 %v581, %v582
  %v586 = vadd.f32 %v585, %v583
  %v587 = vadd.f32 %v586, %v584
  %v588 = vrot.slane %v587, 4
  %v589 = vadd.f32 %v587, %v588
  %v590 = vrot.slane %v589, 2
  %v591 = vadd.f32 %v589, %v590
  %v592 = vrot.slane %v591, 1
  %v593 = vadd.f32 %v591, %v592
  %v594 = vld [vmem:[#allocation2] sm:$0x1]
  %596 = vset.pattern.permute.xlu0 0
  %597 = vperm.xlu0 %596, %v594
  %v598 = vpop.permute.xlu0 %597
  %v600 = vlaneseq
  %v601 = vshrl.u32 %v600, 7
  %v602 = vsub.s32 0, %v601
  %v603 = vrot.slane %v598, %v602
  %v604 = vadd.f32 %v593, %v603
  %605 = vst [vmem:[%s9] sm:$0x1] %v604
  // Predicated region
  $region38: #{boston_model_forward.1} parent=0 // pred_check
    _
  $region39: #{boston_model_forward.1} parent=0 // pred_check_branch
    %607 = sbr.rel (0) target = $region41
  $region40: #{boston_model_forward.1} parent=0 // pred_region
    _
  $region41: #{boston_model_forward.1} parent=0 // pred_fallthru
    _
  // Predicated region
  $region42: #{boston_model_forward.1} parent=0 // pred_check
    _
  $region43: #{boston_model_forward.1} parent=0 // pred_check_branch
    %609 = sbr.rel (0) target = $region45
  $region44: #{boston_model_forward.1} parent=0 // pred_region
    _
  $region45: #{boston_model_forward.1} parent=0 // pred_fallthru
    _

</llo_original>
